<compile_context>
chip_gen: v6e
topology: v6e:2x2x1
jax: 0.10.0
libtpu: 0.0.40
codegen_flags: <defaults>
</compile_context>

<pallas_src>
import functools

import jax
import jax.numpy as jnp
from jax.experimental import pallas as pl
from jax.experimental.pallas import tpu as pltpu

EPS = 1e-5   # PyTorch BatchNorm2d default eps


# ----------------------------------------------------------------------------
# Fused Pallas kernel
# ----------------------------------------------------------------------------
def _fused_kernel(x_ref, w1_ref, b1_ref, w2_ref, b2_ref, w3_ref, b3_ref,
                  o_ref, *, height, width):
    """conv1+bn1+relu -> merged mobility||king 3x3 conv+relu -> 1x1 integration
    conv + folded bn_out + relu + residual, on (channels, positions) slabs."""
    L = o_ref.shape[1]                     # positions handled by this block
    board = height * width

    # ---- per-lane board coordinates (blocks hold whole boards, identical
    # pattern for every grid step) -> in-kernel tap-validity masks -----------
    lane = jax.lax.broadcasted_iota(jnp.int32, (1, L), 1)
    if (width & (width - 1)) == 0 and (height & (height - 1)) == 0:
        ww = lane & (width - 1)                          # cheap bit ops
        hh = (lane >> (width.bit_length() - 1)) & (height - 1)
    else:
        ww = lane % width
        hh = (lane // width) % height

    def tap_mask(dy, dx):
        conds = []
        if dy == 0:
            conds.append(hh >= 1)
        elif dy == 2:
            conds.append(hh <= height - 2)
        if dx == 0:
            conds.append(ww >= 1)
        elif dx == 2:
            conds.append(ww <= width - 2)
        if not conds:
            return None                                  # center tap: all valid
        m = conds[0]
        for c in conds[1:]:
            m = jnp.logical_and(m, c)
        return m.astype(jnp.float32)                     # (1, L)

    masks = [tap_mask(*divmod(t, 3)) for t in range(9)]

    def gather_taps(a):
        # 3x3 neighborhood of every position via XLU lane rolls + masks
        # (masks zero every out-of-board / cross-board / wrapped neighbor),
        # stacked along K so each conv stage is ONE MXU matmul.
        taps = []
        for t in range(9):
            dy, dx = divmod(t, 3)
            off = (dy - 1) * width + (dx - 1)
            s = a if off == 0 else pltpu.roll(a, shift=(-off) % L, axis=1)
            taps.append(s if masks[t] is None else s * masks[t])
        return jnp.concatenate(taps, axis=0)

    x = x_ref[...]                                       # (CP, L)

    # ---- stage 1: conv1 (3x3) + folded bn1 (scale pre-folded into W) + ReLU -
    feat = jnp.maximum(
        jnp.dot(w1_ref[...], gather_taps(x),
                preferred_element_type=jnp.float32) + b1_ref[...], 0.0)

    # ---- stage 2a: mobility||king 3x3 convs as one (16,144)x(144,L) matmul --
    comb = jnp.maximum(
        jnp.dot(w2_ref[...], gather_taps(feat),
                preferred_element_type=jnp.float32) + b2_ref[...], 0.0)

    # ---- stage 2b: 1x1 integration conv (+folded bn_out) + ReLU + residual --
    y = jnp.dot(w3_ref[...], comb, preferred_element_type=jnp.float32)
    o_ref[...] = jnp.maximum(y + b3_ref[...], 0.0) + x


# ----------------------------------------------------------------------------
# Wrapper: layout glue only (channel<->sublane / NHW<->lane transposes).
# ----------------------------------------------------------------------------
def _pick_boards_per_block(n_boards, hw, max_lanes=2048):
    """Boards per block: lane count multiple of 128, prefer >=2 (even) grid
    steps so v7x's two TensorCores both get work, then the largest block."""
    cands = [b for b in range(1, n_boards + 1)
             if n_boards % b == 0 and (b * hw) % 128 == 0
             and b * hw <= max_lanes]
    if not cands:
        return n_boards                     # grid=1; block == full array
    even = [b for b in cands if (n_boards // b) % 2 == 0]
    multi = [b for b in cands if n_boards // b >= 2]
    pool = even or multi or cands
    return max(pool)


def chess_feature_extractor(x_nchw, params):
    N, C, H, W = x_nchw.shape
    CP = ((C + 7) // 8) * 8                 # pad channels to full sublanes
    HW, NHW = H * W, N * H * W
    x = x_nchw.astype(jnp.float32)

    bpb = _pick_boards_per_block(N, HW)
    L = bpb * HW                            # lanes (positions) per grid step
    grid = (NHW // L,)

    # channels -> sublanes (zero-padded to CP), N*H*W -> lanes
    x_cm = jnp.transpose(x, (1, 0, 2, 3)).reshape(C, NHW)
    x_cm = jnp.pad(x_cm, ((0, CP - C), (0, 0)))

    kernel = functools.partial(_fused_kernel, height=H, width=W)

    out_cm = pl.pallas_call(
        kernel,
        out_shape=jax.ShapeDtypeStruct((CP, NHW), jnp.float32),
        grid=grid,
        in_specs=[
            pl.BlockSpec((CP, L), lambda i: (0, i)),        # x (conv1 + residual)
            pl.BlockSpec((16, 9 * CP), lambda i: (0, 0)),   # conv1 W (bn1-scaled)
            pl.BlockSpec((16, 1), lambda i: (0, 0)),        # bn1 folded bias
            pl.BlockSpec((16, 144), lambda i: (0, 0)),      # mob||king tap W
            pl.BlockSpec((16, 1), lambda i: (0, 0)),        # mob||king bias
            pl.BlockSpec((CP, 16), lambda i: (0, 0)),       # integration W (bn_out-scaled)
            pl.BlockSpec((CP, 1), lambda i: (0, 0)),        # bn_out folded bias
        ],
        out_specs=pl.BlockSpec((CP, L), lambda i: (0, i)),
        compiler_params=pltpu.CompilerParams(
            dimension_semantics=("parallel",)),
    )(x_cm, params['w1'], params['b1'], params['w2'], params['b2'],
      params['w3'], params['b3'])

    out = out_cm[:C].reshape(C, N, H, W)
    return jnp.transpose(out, (1, 0, 2, 3))


# ----------------------------------------------------------------------------
# Deterministic synthetic parameters (PyTorch layouts), then fold for the kernel
# ----------------------------------------------------------------------------
def init_raw_params(key, cin):
    ks = jax.random.split(key, 16)
    n = lambda k, s, sc=0.1: sc * jax.random.normal(k, s, jnp.float32)
    return dict(
        w1=n(ks[0], (16, cin, 3, 3)), b1=n(ks[1], (16,)),
        g1=1.0 + n(ks[2], (16,)), be1=n(ks[3], (16,)),
        m1=n(ks[4], (16,)), v1=0.5 + jnp.abs(n(ks[5], (16,))),
        wm=n(ks[6], (8, 16, 3, 3)), bm=n(ks[7], (8,)),
        wk=n(ks[8], (8, 16, 3, 3)), bk=n(ks[9], (8,)),
        wi=n(ks[10], (cin, 16, 1, 1)), bi=n(ks[11], (cin,)),
        go=1.0 + n(ks[12], (cin,)), beo=n(ks[13], (cin,)),
        mo=n(ks[14], (cin,)), vo=0.5 + jnp.abs(n(ks[15], (cin,))),
    )


def fold_params(rp):
    cin = rp['wi'].shape[0]
    cp = ((cin + 7) // 8) * 8

    # conv1: fold bn1 scale into the weight; cin zero-padded to cp.
    # column order of the (16, 9*cp) weight = [tap (ky,kx)][cin] to match the
    # in-kernel tap concatenation order.
    s1 = rp['g1'] / jnp.sqrt(rp['v1'] + EPS)
    b1 = rp['be1'] + s1 * (rp['b1'] - rp['m1'])
    w1p = jnp.pad(rp['w1'], ((0, 0), (0, cp - cin), (0, 0), (0, 0)))
    w1_2d = jnp.transpose(w1p, (2, 3, 1, 0)).reshape(9 * cp, 16).T
    w1_2d = s1[:, None] * w1_2d

    # merged mobility||king 3x3 weights, columns ordered [tap][feat-channel]
    wcat = jnp.concatenate([rp['wm'], rp['wk']], axis=0)          # (16,16,3,3)
    w2_2d = jnp.transpose(wcat, (2, 3, 1, 0)).reshape(144, 16).T  # (16, 144)
    bmk = jnp.concatenate([rp['bm'], rp['bk']], axis=0)

    # 1x1 integration conv: fold bn_out scale into the weight (integration
    # bias folded into the bn_out bias); output rows zero-padded to cp.
    so = rp['go'] / jnp.sqrt(rp['vo'] + EPS)
    bo = rp['beo'] + so * (rp['bi'] - rp['mo'])
    wint = so[:, None] * rp['wi'][:, :, 0, 0]                     # (cin, 16)
    wint = jnp.pad(wint, ((0, cp - cin), (0, 0)))
    bo = jnp.pad(bo, (0, cp - cin))

    return dict(w1=w1_2d, b1=b1[:, None], w2=w2_2d, b2=bmk[:, None],
                w3=wint, b3=bo[:, None])


# ----------------------------------------------------------------------------
# Pure-JAX reference (mirrors the PyTorch forward, NCHW / OIHW, eval-mode BN)
# ----------------------------------------------------------------------------
def reference(x, rp):
    dn = ('NCHW', 'OIHW', 'NCHW')

    def conv(z, w, b, pad):
        y = jax.lax.conv_general_dilated(z, w, (1, 1), [(pad, pad), (pad, pad)],
                                         dimension_numbers=dn)
        return y + b[None, :, None, None]

    def bn(z, g, bt, m, v):
        return ((z - m[None, :, None, None])
                / jnp.sqrt(v[None, :, None, None] + EPS)
                * g[None, :, None, None] + bt[None, :, None, None])

    f = jax.nn.relu(bn(conv(x, rp['w1'], rp['b1'], 1),
                       rp['g1'], rp['be1'], rp['m1'], rp['v1']))
    mob = jax.nn.relu(conv(f, rp['wm'], rp['bm'], 1))
    king = jax.nn.relu(conv(f, rp['wk'], rp['bk'], 1))
    comb = jnp.concatenate([mob, king], axis=1)
    enh = jax.nn.relu(bn(conv(comb, rp['wi'], rp['bi'], 0),
                         rp['go'], rp['beo'], rp['mo'], rp['vo']))
    return enh + x


if __name__ == "__main__":
    key = jax.random.PRNGKey(0)
    kx, kp = jax.random.split(key)

    # chess boards: 8x8 spatial, small plane count; N=4 gives a 2-step grid
    # (exercises pipelining / the v7x dual-TensorCore split and cross-block
    # mask correctness).
    N, CIN, H, W = 4, 4, 8, 8
    x = jax.random.normal(kx, (N, CIN, H, W), jnp.float32)

    raw = init_raw_params(kp, CIN)
    folded = fold_params(raw)

    fwd = jax.jit(functools.partial(chess_feature_extractor, params=folded))
    out = jax.block_until_ready(fwd(x))

    assert out.shape == x.shape and out.dtype == jnp.float32

    ref = jax.block_until_ready(reference(x, raw))
    # Loose tolerance: both paths use TPU default (reduced) f32 matmul precision.
    err = float(jnp.max(jnp.abs(out - ref)))
    if err > 2e-2:
        raise AssertionError(f"kernel/reference mismatch, max abs err = {err}")

    print("KERNEL_OK")
</pallas_src>

<mosaic_0001>
module attributes {stable_mosaic.version = 11 : i64} {
  func.func @_fused_kernel(%arg0: i32, %arg1: memref<8x128xf32, #tpu.memory_space<vmem>>, %arg2: memref<16x72xf32, #tpu.memory_space<vmem>>, %arg3: memref<16x1xf32, #tpu.memory_space<vmem>>, %arg4: memref<16x144xf32, #tpu.memory_space<vmem>>, %arg5: memref<16x1xf32, #tpu.memory_space<vmem>>, %arg6: memref<8x16xf32, #tpu.memory_space<vmem>>, %arg7: memref<8x1xf32, #tpu.memory_space<vmem>>, %arg8: memref<8x128xf32, #tpu.memory_space<vmem>>) attributes {dimension_semantics = [#tpu.dimension_semantics<parallel>], iteration_bounds = array<i64: 2>, scalar_prefetch = 0 : i64, scratch_operands = 0 : i64, tpu.core_type = #tpu.core_type<tc>, window_params = [{transform_indices = @transform_0, window_bounds = array<i64: 8, 128>}, {pipeline_mode = #tpu.pipeline_mode<synchronous>, transform_indices = @transform_1, window_bounds = array<i64: 16, 72>}, {pipeline_mode = #tpu.pipeline_mode<synchronous>, transform_indices = @transform_2, window_bounds = array<i64: 16, 1>}, {pipeline_mode = #tpu.pipeline_mode<synchronous>, transform_indices = @transform_3, window_bounds = array<i64: 16, 144>}, {pipeline_mode = #tpu.pipeline_mode<synchronous>, transform_indices = @transform_4, window_bounds = array<i64: 16, 1>}, {pipeline_mode = #tpu.pipeline_mode<synchronous>, transform_indices = @transform_5, window_bounds = array<i64: 8, 16>}, {pipeline_mode = #tpu.pipeline_mode<synchronous>, transform_indices = @transform_6, window_bounds = array<i64: 8, 1>}, {transform_indices = @transform_7, window_bounds = array<i64: 8, 128>}]} {
    %0 = tpu.iota {dimensions = array<i32: 1>} : vector<1x128xi32>
    %c7_i32 = arith.constant 7 : i32
    %1 = vector.broadcast %c7_i32 : i32 to vector<1x128xi32>
    %2 = arith.andi %0, %1 : vector<1x128xi32>
    %c3_i32 = arith.constant 3 : i32
    %3 = vector.broadcast %c3_i32 : i32 to vector<1x128xi32>
    %4 = arith.shrsi %0, %3 : vector<1x128xi32>
    %c7_i32_0 = arith.constant 7 : i32
    %5 = vector.broadcast %c7_i32_0 : i32 to vector<1x128xi32>
    %6 = arith.andi %4, %5 : vector<1x128xi32>
    %c1_i32 = arith.constant 1 : i32
    %7 = vector.broadcast %c1_i32 : i32 to vector<1x128xi32>
    %8 = arith.cmpi sge, %6, %7 : vector<1x128xi32>
    %c1_i32_1 = arith.constant 1 : i32
    %9 = vector.broadcast %c1_i32_1 : i32 to vector<1x128xi32>
    %10 = arith.cmpi sge, %2, %9 : vector<1x128xi32>
    %11 = arith.andi %8, %10 : vector<1x128xi1>
    %12 = arith.extui %11 : vector<1x128xi1> to vector<1x128xi32>
    %13 = arith.sitofp %12 : vector<1x128xi32> to vector<1x128xf32>
    %c1_i32_2 = arith.constant 1 : i32
    %14 = vector.broadcast %c1_i32_2 : i32 to vector<1x128xi32>
    %15 = arith.cmpi sge, %6, %14 : vector<1x128xi32>
    %16 = arith.extui %15 : vector<1x128xi1> to vector<1x128xi32>
    %17 = arith.sitofp %16 : vector<1x128xi32> to vector<1x128xf32>
    %c1_i32_3 = arith.constant 1 : i32
    %18 = vector.broadcast %c1_i32_3 : i32 to vector<1x128xi32>
    %19 = arith.cmpi sge, %6, %18 : vector<1x128xi32>
    %c6_i32 = arith.constant 6 : i32
    %20 = vector.broadcast %c6_i32 : i32 to vector<1x128xi32>
    %21 = arith.cmpi sle, %2, %20 : vector<1x128xi32>
    %22 = arith.andi %19, %21 : vector<1x128xi1>
    %23 = arith.extui %22 : vector<1x128xi1> to vector<1x128xi32>
    %24 = arith.sitofp %23 : vector<1x128xi32> to vector<1x128xf32>
    %c1_i32_4 = arith.constant 1 : i32
    %25 = vector.broadcast %c1_i32_4 : i32 to vector<1x128xi32>
    %26 = arith.cmpi sge, %2, %25 : vector<1x128xi32>
    %27 = arith.extui %26 : vector<1x128xi1> to vector<1x128xi32>
    %28 = arith.sitofp %27 : vector<1x128xi32> to vector<1x128xf32>
    %c6_i32_5 = arith.constant 6 : i32
    %29 = vector.broadcast %c6_i32_5 : i32 to vector<1x128xi32>
    %30 = arith.cmpi sle, %2, %29 : vector<1x128xi32>
    %31 = arith.extui %30 : vector<1x128xi1> to vector<1x128xi32>
    %32 = arith.sitofp %31 : vector<1x128xi32> to vector<1x128xf32>
    %c6_i32_6 = arith.constant 6 : i32
    %33 = vector.broadcast %c6_i32_6 : i32 to vector<1x128xi32>
    %34 = arith.cmpi sle, %6, %33 : vector<1x128xi32>
    %c1_i32_7 = arith.constant 1 : i32
    %35 = vector.broadcast %c1_i32_7 : i32 to vector<1x128xi32>
    %36 = arith.cmpi sge, %2, %35 : vector<1x128xi32>
    %37 = arith.andi %34, %36 : vector<1x128xi1>
    %38 = arith.extui %37 : vector<1x128xi1> to vector<1x128xi32>
    %39 = arith.sitofp %38 : vector<1x128xi32> to vector<1x128xf32>
    %c6_i32_8 = arith.constant 6 : i32
    %40 = vector.broadcast %c6_i32_8 : i32 to vector<1x128xi32>
    %41 = arith.cmpi sle, %6, %40 : vector<1x128xi32>
    %42 = arith.extui %41 : vector<1x128xi1> to vector<1x128xi32>
    %43 = arith.sitofp %42 : vector<1x128xi32> to vector<1x128xf32>
    %c6_i32_9 = arith.constant 6 : i32
    %44 = vector.broadcast %c6_i32_9 : i32 to vector<1x128xi32>
    %45 = arith.cmpi sle, %6, %44 : vector<1x128xi32>
    %c6_i32_10 = arith.constant 6 : i32
    %46 = vector.broadcast %c6_i32_10 : i32 to vector<1x128xi32>
    %47 = arith.cmpi sle, %2, %46 : vector<1x128xi32>
    %48 = arith.andi %45, %47 : vector<1x128xi1>
    %49 = arith.extui %48 : vector<1x128xi1> to vector<1x128xi32>
    %50 = arith.sitofp %49 : vector<1x128xi32> to vector<1x128xf32>
    %c0 = arith.constant 0 : index
    %c0_11 = arith.constant 0 : index
    %51 = vector.load %arg1[%c0, %c0_11] : memref<8x128xf32, #tpu.memory_space<vmem>>, vector<8x128xf32>
    %c0_12 = arith.constant 0 : index
    %c0_13 = arith.constant 0 : index
    %52 = vector.load %arg2[%c0_12, %c0_13] : memref<16x72xf32, #tpu.memory_space<vmem>>, vector<16x72xf32>
    %c9_i32 = arith.constant 9 : i32
    %53 = tpu.dynamic_rotate %51 by %c9_i32 dim 1 : vector<8x128xf32>, i32 -> vector<8x128xf32>
    %54 = vector.broadcast %13 : vector<1x128xf32> to vector<8x128xf32>
    %55 = arith.mulf %53, %54 : vector<8x128xf32>
    %c8_i32 = arith.constant 8 : i32
    %56 = tpu.dynamic_rotate %51 by %c8_i32 dim 1 : vector<8x128xf32>, i32 -> vector<8x128xf32>
    %57 = vector.broadcast %17 : vector<1x128xf32> to vector<8x128xf32>
    %58 = arith.mulf %56, %57 : vector<8x128xf32>
    %c7_i32_14 = arith.constant 7 : i32
    %59 = tpu.dynamic_rotate %51 by %c7_i32_14 dim 1 : vector<8x128xf32>, i32 -> vector<8x128xf32>
    %60 = vector.broadcast %24 : vector<1x128xf32> to vector<8x128xf32>
    %61 = arith.mulf %59, %60 : vector<8x128xf32>
    %c1_i32_15 = arith.constant 1 : i32
    %62 = tpu.dynamic_rotate %51 by %c1_i32_15 dim 1 : vector<8x128xf32>, i32 -> vector<8x128xf32>
    %63 = vector.broadcast %28 : vector<1x128xf32> to vector<8x128xf32>
    %64 = arith.mulf %62, %63 : vector<8x128xf32>
    %c127_i32 = arith.constant 127 : i32
    %65 = tpu.dynamic_rotate %51 by %c127_i32 dim 1 : vector<8x128xf32>, i32 -> vector<8x128xf32>
    %66 = vector.broadcast %32 : vector<1x128xf32> to vector<8x128xf32>
    %67 = arith.mulf %65, %66 : vector<8x128xf32>
    %c121_i32 = arith.constant 121 : i32
    %68 = tpu.dynamic_rotate %51 by %c121_i32 dim 1 : vector<8x128xf32>, i32 -> vector<8x128xf32>
    %69 = vector.broadcast %39 : vector<1x128xf32> to vector<8x128xf32>
    %70 = arith.mulf %68, %69 : vector<8x128xf32>
    %c120_i32 = arith.constant 120 : i32
    %71 = tpu.dynamic_rotate %51 by %c120_i32 dim 1 : vector<8x128xf32>, i32 -> vector<8x128xf32>
    %72 = vector.broadcast %43 : vector<1x128xf32> to vector<8x128xf32>
    %73 = arith.mulf %71, %72 : vector<8x128xf32>
    %c119_i32 = arith.constant 119 : i32
    %74 = tpu.dynamic_rotate %51 by %c119_i32 dim 1 : vector<8x128xf32>, i32 -> vector<8x128xf32>
    %75 = vector.broadcast %50 : vector<1x128xf32> to vector<8x128xf32>
    %76 = arith.mulf %74, %75 : vector<8x128xf32>
    %77 = tpu.concatenate %55, %58, %61, %64, %51, %67, %70, %73, %76 in 0 : vector<8x128xf32>, vector<8x128xf32>, vector<8x128xf32>, vector<8x128xf32>, vector<8x128xf32>, vector<8x128xf32>, vector<8x128xf32>, vector<8x128xf32>, vector<8x128xf32> -> vector<72x128xf32>
    %cst = arith.constant dense<0.000000e+00> : vector<16x128xf32>
    %78 = tpu.matmul %52, %77, %cst {dimension_numbers = #tpu.dot_dimension_numbers<[1], [0], [0], [1], [0, 0, 1, 1], [], []>} : vector<16x72xf32>, vector<72x128xf32>, vector<16x128xf32> -> vector<16x128xf32>
    %c0_16 = arith.constant 0 : index
    %c0_17 = arith.constant 0 : index
    %79 = vector.load %arg3[%c0_16, %c0_17] : memref<16x1xf32, #tpu.memory_space<vmem>>, vector<16x1xf32>
    %80 = vector.broadcast %79 : vector<16x1xf32> to vector<16x128xf32>
    %81 = arith.addf %78, %80 : vector<16x128xf32>
    %cst_18 = arith.constant 0.000000e+00 : f32
    %82 = vector.broadcast %cst_18 : f32 to vector<16x128xf32>
    %83 = arith.maximumf %81, %82 : vector<16x128xf32>
    %c0_19 = arith.constant 0 : index
    %c0_20 = arith.constant 0 : index
    %84 = vector.load %arg4[%c0_19, %c0_20] : memref<16x144xf32, #tpu.memory_space<vmem>>, vector<16x144xf32>
    %c9_i32_21 = arith.constant 9 : i32
    %85 = tpu.dynamic_rotate %83 by %c9_i32_21 dim 1 : vector<16x128xf32>, i32 -> vector<16x128xf32>
    %86 = vector.broadcast %13 : vector<1x128xf32> to vector<16x128xf32>
    %87 = arith.mulf %85, %86 : vector<16x128xf32>
    %c8_i32_22 = arith.constant 8 : i32
    %88 = tpu.dynamic_rotate %83 by %c8_i32_22 dim 1 : vector<16x128xf32>, i32 -> vector<16x128xf32>
    %89 = vector.broadcast %17 : vector<1x128xf32> to vector<16x128xf32>
    %90 = arith.mulf %88, %89 : vector<16x128xf32>
    %c7_i32_23 = arith.constant 7 : i32
    %91 = tpu.dynamic_rotate %83 by %c7_i32_23 dim 1 : vector<16x128xf32>, i32 -> vector<16x128xf32>
    %92 = vector.broadcast %24 : vector<1x128xf32> to vector<16x128xf32>
    %93 = arith.mulf %91, %92 : vector<16x128xf32>
    %c1_i32_24 = arith.constant 1 : i32
    %94 = tpu.dynamic_rotate %83 by %c1_i32_24 dim 1 : vector<16x128xf32>, i32 -> vector<16x128xf32>
    %95 = vector.broadcast %28 : vector<1x128xf32> to vector<16x128xf32>
    %96 = arith.mulf %94, %95 : vector<16x128xf32>
    %c127_i32_25 = arith.constant 127 : i32
    %97 = tpu.dynamic_rotate %83 by %c127_i32_25 dim 1 : vector<16x128xf32>, i32 -> vector<16x128xf32>
    %98 = vector.broadcast %32 : vector<1x128xf32> to vector<16x128xf32>
    %99 = arith.mulf %97, %98 : vector<16x128xf32>
    %c121_i32_26 = arith.constant 121 : i32
    %100 = tpu.dynamic_rotate %83 by %c121_i32_26 dim 1 : vector<16x128xf32>, i32 -> vector<16x128xf32>
    %101 = vector.broadcast %39 : vector<1x128xf32> to vector<16x128xf32>
    %102 = arith.mulf %100, %101 : vector<16x128xf32>
    %c120_i32_27 = arith.constant 120 : i32
    %103 = tpu.dynamic_rotate %83 by %c120_i32_27 dim 1 : vector<16x128xf32>, i32 -> vector<16x128xf32>
    %104 = vector.broadcast %43 : vector<1x128xf32> to vector<16x128xf32>
    %105 = arith.mulf %103, %104 : vector<16x128xf32>
    %c119_i32_28 = arith.constant 119 : i32
    %106 = tpu.dynamic_rotate %83 by %c119_i32_28 dim 1 : vector<16x128xf32>, i32 -> vector<16x128xf32>
    %107 = vector.broadcast %50 : vector<1x128xf32> to vector<16x128xf32>
    %108 = arith.mulf %106, %107 : vector<16x128xf32>
    %109 = tpu.concatenate %87, %90, %93, %96, %83, %99, %102, %105, %108 in 0 : vector<16x128xf32>, vector<16x128xf32>, vector<16x128xf32>, vector<16x128xf32>, vector<16x128xf32>, vector<16x128xf32>, vector<16x128xf32>, vector<16x128xf32>, vector<16x128xf32> -> vector<144x128xf32>
    %cst_29 = arith.constant dense<0.000000e+00> : vector<16x128xf32>
    %110 = tpu.matmul %84, %109, %cst_29 {dimension_numbers = #tpu.dot_dimension_numbers<[1], [0], [0], [1], [0, 0, 1, 1], [], []>} : vector<16x144xf32>, vector<144x128xf32>, vector<16x128xf32> -> vector<16x128xf32>
    %c0_30 = arith.constant 0 : index
    %c0_31 = arith.constant 0 : index
    %111 = vector.load %arg5[%c0_30, %c0_31] : memref<16x1xf32, #tpu.memory_space<vmem>>, vector<16x1xf32>
    %112 = vector.broadcast %111 : vector<16x1xf32> to vector<16x128xf32>
    %113 = arith.addf %110, %112 : vector<16x128xf32>
    %cst_32 = arith.constant 0.000000e+00 : f32
    %114 = vector.broadcast %cst_32 : f32 to vector<16x128xf32>
    %115 = arith.maximumf %113, %114 : vector<16x128xf32>
    %c0_33 = arith.constant 0 : index
    %c0_34 = arith.constant 0 : index
    %116 = vector.load %arg6[%c0_33, %c0_34] : memref<8x16xf32, #tpu.memory_space<vmem>>, vector<8x16xf32>
    %cst_35 = arith.constant dense<0.000000e+00> : vector<8x128xf32>
    %117 = tpu.matmul %116, %115, %cst_35 {dimension_numbers = #tpu.dot_dimension_numbers<[1], [0], [0], [1], [0, 0, 1, 1], [], []>} : vector<8x16xf32>, vector<16x128xf32>, vector<8x128xf32> -> vector<8x128xf32>
    %c0_36 = arith.constant 0 : index
    %c0_37 = arith.constant 0 : index
    %118 = vector.load %arg7[%c0_36, %c0_37] : memref<8x1xf32, #tpu.memory_space<vmem>>, vector<8x1xf32>
    %119 = vector.broadcast %118 : vector<8x1xf32> to vector<8x128xf32>
    %120 = arith.addf %117, %119 : vector<8x128xf32>
    %cst_38 = arith.constant 0.000000e+00 : f32
    %121 = vector.broadcast %cst_38 : f32 to vector<8x128xf32>
    %122 = arith.maximumf %120, %121 : vector<8x128xf32>
    %123 = arith.addf %122, %51 : vector<8x128xf32>
    %c0_39 = arith.constant 0 : index
    %c0_40 = arith.constant 0 : index
    %124 = vector.load %arg8[%c0_39, %c0_40] : memref<8x128xf32, #tpu.memory_space<vmem>>, vector<8x128xf32>
    tpu.vector_store %arg8[%c0_39, %c0_40], %123 {strides = array<i32>} : memref<8x128xf32, #tpu.memory_space<vmem>>, vector<8x128xf32>,
    return
  }
  func.func @transform_0(%arg0: i32) -> (i32, i32) {
    %c0_i32 = arith.constant 0 : i32
    %c0_i32_0 = arith.constant 0 : i32
    return %c0_i32, %arg0 : i32, i32
  }
  func.func @transform_1(%arg0: i32) -> (i32, i32) {
    %c0_i32 = arith.constant 0 : i32
    %c0_i32_0 = arith.constant 0 : i32
    %c0_i32_1 = arith.constant 0 : i32
    return %c0_i32, %c0_i32_0 : i32, i32
  }
  func.func @transform_2(%arg0: i32) -> (i32, i32) {
    %c0_i32 = arith.constant 0 : i32
    %c0_i32_0 = arith.constant 0 : i32
    %c0_i32_1 = arith.constant 0 : i32
    return %c0_i32, %c0_i32_0 : i32, i32
  }
  func.func @transform_3(%arg0: i32) -> (i32, i32) {
    %c0_i32 = arith.constant 0 : i32
    %c0_i32_0 = arith.constant 0 : i32
    %c0_i32_1 = arith.constant 0 : i32
    return %c0_i32, %c0_i32_0 : i32, i32
  }
  func.func @transform_4(%arg0: i32) -> (i32, i32) {
    %c0_i32 = arith.constant 0 : i32
    %c0_i32_0 = arith.constant 0 : i32
    %c0_i32_1 = arith.constant 0 : i32
    return %c0_i32, %c0_i32_0 : i32, i32
  }
  func.func @transform_5(%arg0: i32) -> (i32, i32) {
    %c0_i32 = arith.constant 0 : i32
    %c0_i32_0 = arith.constant 0 : i32
    %c0_i32_1 = arith.constant 0 : i32
    return %c0_i32, %c0_i32_0 : i32, i32
  }
  func.func @transform_6(%arg0: i32) -> (i32, i32) {
    %c0_i32 = arith.constant 0 : i32
    %c0_i32_0 = arith.constant 0 : i32
    %c0_i32_1 = arith.constant 0 : i32
    return %c0_i32, %c0_i32_0 : i32, i32
  }
  func.func @transform_7(%arg0: i32) -> (i32, i32) {
    %c0_i32 = arith.constant 0 : i32
    %c0_i32_0 = arith.constant 0 : i32
    return %c0_i32, %arg0 : i32, i32
  }
}

</mosaic_0001>

<llo_original>
// kernel: chess_feature_extractor.1
$region0: #{chess_feature_extractor.1}
  #allocation0 [shape = 'u32[]', space=smem, size = 0x4, offset = 0x4, fixed_abs, tag = 'smem constant byte address 0x4 - core index']
  #allocation1 [shape = 'u32[144,128]{1,0:T(1,128)}', space=vmem, size = 0x12000, scoped, tag = 'internal scratch']
  %s0 = inlined_call_operand.vmem [shape: f32[8,256], index: 0, kind: input, shape index: {}]
  %s1 = inlined_call_operand.vmem [shape: f32[16,72], index: 1, kind: input, shape index: {}]
  %s2 = inlined_call_operand.vmem [shape: f32[16,1], index: 2, kind: input, shape index: {}]
  %s3 = inlined_call_operand.vmem [shape: f32[16,144], index: 3, kind: input, shape index: {}]
  %s4 = inlined_call_operand.vmem [shape: f32[16,1], index: 4, kind: input, shape index: {}]
  %s5 = inlined_call_operand.vmem [shape: f32[8,16], index: 5, kind: input, shape index: {}]
  %s6 = inlined_call_operand.vmem [shape: f32[8,1], index: 6, kind: input, shape index: {}]
  %s7 = inlined_call_operand.vmem [shape: f32[8,256], index: 7, kind: output, shape index: {}]
  %s8 = sld [smem:[#allocation0]]
  $region61: #{chess_feature_extractor.1} parent=0
    _
  %s10 = ssub.s32 1, %s8
  %s11 = scalar_select 0, %s10, %s8
  loop: start=0, step=1, limit=4
  $region2: #{chess_feature_extractor.1} parent=0 // loop_pre_header
    _
  $region3: #{chess_feature_extractor.1} parent=0 // loop_header
    %s13 = sphi 0, %s17
    %p14 = scmp.ge.s32.totalorder %s13, 4
    %s23 = sphi 0, %s25
    %s26 = sphi 0, %s23
    %s27 = sphi 0, %s26
    %s43 = sphi 0, %s27
    %s47 = sphi 0, %s47
    %s49 = sphi 0, %s47
    %s50 = sphi 0, %s49
    %s64 = sphi 0, %s50
    %s68 = sphi 0, %s68
    %s70 = sphi 0, %s68
    %s71 = sphi 0, %s70
    %s85 = sphi 0, %s71
    %s89 = sphi 0, %s89
    %s91 = sphi 0, %s89
    %s92 = sphi 0, %s91
    %s106 = sphi 0, %s92
    %s110 = sphi 0, %s110
    %s112 = sphi 0, %s110
    %s113 = sphi 0, %s112
    %s127 = sphi 0, %s113
    %s131 = sphi 0, %s131
    %s133 = sphi 0, %s131
    %s134 = sphi 0, %s133
    %s148 = sphi 0, %s134
    %s152 = sphi 0, %s152
    %s154 = sphi 0, %s152
    %s155 = sphi 0, %s154
    %s169 = sphi 0, %s155
    %s175 = sphi 0, %s177
    %s178 = sphi 0, %s175
    %s179 = sphi 0, %s178
    %s195 = sphi 0, %s179
  $region4: #{chess_feature_extractor.1} parent=0 // loop_header_branch
    %16 = sbr.rel (%p14) target = $region8
  $region5: #{chess_feature_extractor.1} parent=0 // loop_body
    %s18 = ssub.s32 %s13, 1
    %s19 = ssub.s32 %s13, 2
    %s20 = sadd.s32 %s13, 1
    %s21 = ssub.s32 %s13, %s20
    %p22 = scmp.eq.s32.totalorder %s21, 0
    %s24 = sadd.s32 %s23, 1
    %s25 = scalar_select %p22, %s23, %s24
    %p28 = pneg %p22
    %p29 = scmp.eq.s32.totalorder %s13, 1
    %p30 = por %p28, %p29
    %p31 = scmp.ne.s32.totalorder %s23, %s26
    %p32 = scmp.eq.s32.totalorder %s13, 0
    %p33 = por %p31, %p32
    %p34 = scmp.ne.s32.totalorder %s23, %s26
    %p35 = scmp.eq.s32.totalorder %s18, 1
    %p36 = por %p34, %p35
    %p37 = scmp.ne.s32.totalorder %s26, %s27
    %p38 = scmp.eq.s32.totalorder %s18, 0
    %p39 = por %p37, %p38
    %p40 = scmp.ne.s32.totalorder %s26, %s27
    %p41 = scmp.eq.s32.totalorder %s19, 1
    %p42 = por %p40, %p41
    %p44 = scmp.ne.s32.totalorder %s27, %s43
    %p45 = scmp.eq.s32.totalorder %s19, 0
    %p46 = por %p44, %p45
    %s48 = sadd.s32 %s47, 1
    %p51 = scmp.eq.s32.totalorder %s13, 1
    %p52 = scmp.ne.s32.totalorder %s47, %s49
    %p53 = scmp.eq.s32.totalorder %s13, 0
    %p54 = por %p52, %p53
    %p55 = scmp.ne.s32.totalorder %s47, %s49
    %p56 = scmp.eq.s32.totalorder %s18, 1
    %p57 = por %p55, %p56
    %p58 = scmp.ne.s32.totalorder %s49, %s50
    %p59 = scmp.eq.s32.totalorder %s18, 0
    %p60 = por %p58, %p59
    %p61 = scmp.ne.s32.totalorder %s49, %s50
    %p62 = scmp.eq.s32.totalorder %s19, 1
    %p63 = por %p61, %p62
    %p65 = scmp.ne.s32.totalorder %s50, %s64
    %p66 = scmp.eq.s32.totalorder %s19, 0
    %p67 = por %p65, %p66
    %s69 = sadd.s32 %s68, 1
    %p72 = scmp.eq.s32.totalorder %s13, 1
    %p73 = scmp.ne.s32.totalorder %s68, %s70
    %p74 = scmp.eq.s32.totalorder %s13, 0
    %p75 = por %p73, %p74
    %p76 = scmp.ne.s32.totalorder %s68, %s70
    %p77 = scmp.eq.s32.totalorder %s18, 1
    %p78 = por %p76, %p77
    %p79 = scmp.ne.s32.totalorder %s70, %s71
    %p80 = scmp.eq.s32.totalorder %s18, 0
    %p81 = por %p79, %p80
    %p82 = scmp.ne.s32.totalorder %s70, %s71
    %p83 = scmp.eq.s32.totalorder %s19, 1
    %p84 = por %p82, %p83
    %p86 = scmp.ne.s32.totalorder %s71, %s85
    %p87 = scmp.eq.s32.totalorder %s19, 0
    %p88 = por %p86, %p87
    %s90 = sadd.s32 %s89, 1
    %p93 = scmp.eq.s32.totalorder %s13, 1
    %p94 = scmp.ne.s32.totalorder %s89, %s91
    %p95 = scmp.eq.s32.totalorder %s13, 0
    %p96 = por %p94, %p95
    %p97 = scmp.ne.s32.totalorder %s89, %s91
    %p98 = scmp.eq.s32.totalorder %s18, 1
    %p99 = por %p97, %p98
    %p100 = scmp.ne.s32.totalorder %s91, %s92
    %p101 = scmp.eq.s32.totalorder %s18, 0
    %p102 = por %p100, %p101
    %p103 = scmp.ne.s32.totalorder %s91, %s92
    %p104 = scmp.eq.s32.totalorder %s19, 1
    %p105 = por %p103, %p104
    %p107 = scmp.ne.s32.totalorder %s92, %s106
    %p108 = scmp.eq.s32.totalorder %s19, 0
    %p109 = por %p107, %p108
    %s111 = sadd.s32 %s110, 1
    %p114 = scmp.eq.s32.totalorder %s13, 1
    %p115 = scmp.ne.s32.totalorder %s110, %s112
    %p116 = scmp.eq.s32.totalorder %s13, 0
    %p117 = por %p115, %p116
    %p118 = scmp.ne.s32.totalorder %s110, %s112
    %p119 = scmp.eq.s32.totalorder %s18, 1
    %p120 = por %p118, %p119
    %p121 = scmp.ne.s32.totalorder %s112, %s113
    %p122 = scmp.eq.s32.totalorder %s18, 0
    %p123 = por %p121, %p122
    %p124 = scmp.ne.s32.totalorder %s112, %s113
    %p125 = scmp.eq.s32.totalorder %s19, 1
    %p126 = por %p124, %p125
    %p128 = scmp.ne.s32.totalorder %s113, %s127
    %p129 = scmp.eq.s32.totalorder %s19, 0
    %p130 = por %p128, %p129
    %s132 = sadd.s32 %s131, 1
    %p135 = scmp.eq.s32.totalorder %s13, 1
    %p136 = scmp.ne.s32.totalorder %s131, %s133
    %p137 = scmp.eq.s32.totalorder %s13, 0
    %p138 = por %p136, %p137
    %p139 = scmp.ne.s32.totalorder %s131, %s133
    %p140 = scmp.eq.s32.totalorder %s18, 1
    %p141 = por %p139, %p140
    %p142 = scmp.ne.s32.totalorder %s133, %s134
    %p143 = scmp.eq.s32.totalorder %s18, 0
    %p144 = por %p142, %p143
    %p145 = scmp.ne.s32.totalorder %s133, %s134
    %p146 = scmp.eq.s32.totalorder %s19, 1
    %p147 = por %p145, %p146
    %p149 = scmp.ne.s32.totalorder %s134, %s148
    %p150 = scmp.eq.s32.totalorder %s19, 0
    %p151 = por %p149, %p150
    %s153 = sadd.s32 %s152, 1
    %p156 = scmp.eq.s32.totalorder %s13, 1
    %p157 = scmp.ne.s32.totalorder %s152, %s154
    %p158 = scmp.eq.s32.totalorder %s13, 0
    %p159 = por %p157, %p158
    %p160 = scmp.ne.s32.totalorder %s152, %s154
    %p161 = scmp.eq.s32.totalorder %s18, 1
    %p162 = por %p160, %p161
    %p163 = scmp.ne.s32.totalorder %s154, %s155
    %p164 = scmp.eq.s32.totalorder %s18, 0
    %p165 = por %p163, %p164
    %p166 = scmp.ne.s32.totalorder %s154, %s155
    %p167 = scmp.eq.s32.totalorder %s19, 1
    %p168 = por %p166, %p167
    %p170 = scmp.ne.s32.totalorder %s155, %s169
    %p171 = scmp.eq.s32.totalorder %s19, 0
    %p172 = por %p170, %p171
    %s173 = ssub.s32 %s13, %s20
    %p174 = scmp.eq.s32.totalorder %s173, 0
    %s176 = sadd.s32 %s175, 1
    %s177 = scalar_select %p174, %s175, %s176
    %p180 = pneg %p174
    %p181 = scmp.eq.s32.totalorder %s13, 1
    %p182 = por %p180, %p181
    %p183 = scmp.ne.s32.totalorder %s175, %s178
    %p184 = scmp.eq.s32.totalorder %s13, 0
    %p185 = por %p183, %p184
    %p186 = scmp.ne.s32.totalorder %s175, %s178
    %p187 = scmp.eq.s32.totalorder %s18, 1
    %p188 = por %p186, %p187
    %p189 = scmp.ne.s32.totalorder %s178, %s179
    %p190 = scmp.eq.s32.totalorder %s18, 0
    %p191 = por %p189, %p190
    %p192 = scmp.ne.s32.totalorder %s178, %s179
    %p193 = scmp.eq.s32.totalorder %s19, 1
    %p194 = por %p192, %p193
    %p196 = scmp.ne.s32.totalorder %s179, %s195
    %p197 = scmp.eq.s32.totalorder %s19, 0
    %p198 = por %p196, %p197
    %p199 = scmp.le.s32.totalorder 1, %s13
    %p200 = scmp.lt.s32.totalorder %s13, 3
    %p201 = pnand %p199, %p200
    %p202 = pneg %p201
    // Predicated region
    $region9: #{chess_feature_extractor.1} parent=5 // pred_check
      _
    $region10: #{chess_feature_extractor.1} parent=5 // pred_check_branch
      %204 = sbr.rel (%p201) target = $region12
    $region11: #{chess_feature_extractor.1} parent=5 // pred_region
      %s205 = ssub.s32 %s13, 1
      // Predicated region
      $region13: #{chess_feature_extractor.1} parent=11 // pred_check
        %p206 = pneg %p60
      $region14: #{chess_feature_extractor.1} parent=11 // pred_check_branch
        %208 = sbr.rel (%p206) target = $region16
      $region15: #{chess_feature_extractor.1} parent=11 // pred_region
        _
      $region16: #{chess_feature_extractor.1} parent=11 // pred_fallthru
        _
      // Predicated region
      $region17: #{chess_feature_extractor.1} parent=11 // pred_check
        %p209 = pneg %p81
      $region18: #{chess_feature_extractor.1} parent=11 // pred_check_branch
        %211 = sbr.rel (%p209) target = $region20
      $region19: #{chess_feature_extractor.1} parent=11 // pred_region
        _
      $region20: #{chess_feature_extractor.1} parent=11 // pred_fallthru
        _
      // Predicated region
      $region21: #{chess_feature_extractor.1} parent=11 // pred_check
        %p212 = pneg %p102
      $region22: #{chess_feature_extractor.1} parent=11 // pred_check_branch
        %214 = sbr.rel (%p212) target = $region24
      $region23: #{chess_feature_extractor.1} parent=11 // pred_region
        _
      $region24: #{chess_feature_extractor.1} parent=11 // pred_fallthru
        _
      // Predicated region
      $region25: #{chess_feature_extractor.1} parent=11 // pred_check
        %p215 = pneg %p123
      $region26: #{chess_feature_extractor.1} parent=11 // pred_check_branch
        %217 = sbr.rel (%p215) target = $region28
      $region27: #{chess_feature_extractor.1} parent=11 // pred_region
        _
      $region28: #{chess_feature_extractor.1} parent=11 // pred_fallthru
        _
      // Predicated region
      $region29: #{chess_feature_extractor.1} parent=11 // pred_check
        %p218 = pneg %p144
      $region30: #{chess_feature_extractor.1} parent=11 // pred_check_branch
        %220 = sbr.rel (%p218) target = $region32
      $region31: #{chess_feature_extractor.1} parent=11 // pred_region
        _
      $region32: #{chess_feature_extractor.1} parent=11 // pred_fallthru
        _
      // Predicated region
      $region33: #{chess_feature_extractor.1} parent=11 // pred_check
        %p221 = pneg %p165
      $region34: #{chess_feature_extractor.1} parent=11 // pred_check_branch
        %223 = sbr.rel (%p221) target = $region36
      $region35: #{chess_feature_extractor.1} parent=11 // pred_region
        _
      $region36: #{chess_feature_extractor.1} parent=11 // pred_fallthru
        _
    $region12: #{chess_feature_extractor.1} parent=5 // pred_fallthru
      _
    %p224 = scmp.lt.s32.totalorder %s13, 2
    // Predicated region
    $region37: #{chess_feature_extractor.1} parent=5 // pred_check
      %p225 = pneg %p224
    $region38: #{chess_feature_extractor.1} parent=5 // pred_check_branch
      %227 = sbr.rel (%p225) target = $region40
    $region39: #{chess_feature_extractor.1} parent=5 // pred_region
      // Predicated region
      $region41: #{chess_feature_extractor.1} parent=39 // pred_check
        %p228 = pneg %p33
      $region42: #{chess_feature_extractor.1} parent=39 // pred_check_branch
        %230 = sbr.rel (%p228) target = $region44
      $region43: #{chess_feature_extractor.1} parent=39 // pred_region
        %p231 = scmp.lt.s32.totalorder %s13, 1
        %s232 = scalar_select %p231, %s13, 1
        %s233 = smul.addr %s232, 8
        %s234 = scalar_lea.vmem %s0, %s233
      $region44: #{chess_feature_extractor.1} parent=39 // pred_fallthru
        _
    $region40: #{chess_feature_extractor.1} parent=5 // pred_fallthru
      _
    %p235 = scmp.le.s32.totalorder 1, %s13
    %p236 = scmp.lt.s32.totalorder %s13, 3
    %p237 = pnand %p235, %p236
    %p238 = pneg %p237
    // Predicated region
    $region45: #{chess_feature_extractor.1} parent=5 // pred_check
      _
    $region46: #{chess_feature_extractor.1} parent=5 // pred_check_branch
      %240 = sbr.rel (%p237) target = $region48
    $region47: #{chess_feature_extractor.1} parent=5 // pred_region
      %s241 = ssub.s32 %s13, 1
      %p242 = scmp.lt.s32.totalorder %s18, 1
      %s243 = scalar_select %p242, %s18, 1
      %s244 = smul.addr %s243, 8
      %s245 = scalar_lea.vmem %s0, %s244
      %p246 = pneg %p39
      %p247 = pneg %p36
      %p248 = pneg %p60
      %p249 = pneg %p57
      %p250 = pneg %p81
      %p251 = pneg %p78
      %p252 = pneg %p102
      %p253 = pneg %p99
      %p254 = pneg %p123
      %p255 = pneg %p120
      %p256 = pneg %p144
      %p257 = pneg %p141
      %p258 = pneg %p165
      %p259 = pneg %p162
      %p260 = pneg %p191
      %p261 = pneg %p188
      %p262 = scmp.lt.s32.totalorder %s18, 1
      %s263 = scalar_select %p262, %s18, 1
      %s264 = smul.addr %s263, 8
      %s265 = scalar_lea.vmem %s7, %s264
      %p266 = scmp.lt.s32.totalorder %s18, 1
      %s267 = scalar_select %p266, %s18, 1
      %s268 = smul.addr %s267, 8
      %s269 = scalar_lea.vmem %s0, %s268
      %p270 = scmp.lt.s32.totalorder %s18, 1
      %s271 = scalar_select %p270, %s18, 1
      %s272 = smul.addr %s271, 8
      %s273 = scalar_lea.vmem %s7, %s272
      %v274 = vlaneseq
      %v275 = vand.u32 %v274, 127
      %v276 = vand.u32 %v275, 7
      %v277 = vshra.s32 %v275, 3
      %v278 = vand.u32 %v277, 7
      %vm279 = vcmp.ge.s32.totalorder %v278, 1
      %vm280 = vcmp.ge.s32.totalorder %v276, 1
      %vm281 = vmand %vm279, %vm280
      %v282 = vsel %vm281, 1, 0
      %v283 = vcvt.s32.f32 %v282
      %v284 = vsel %vm279, 1, 0
      %v285 = vcvt.s32.f32 %v284
      %vm286 = vcmp.le.s32.totalorder %v276, 6
      %vm287 = vmand %vm279, %vm286
      %v288 = vsel %vm287, 1, 0
      %v289 = vcvt.s32.f32 %v288
      %v290 = vsel %vm280, 1, 0
      %v291 = vcvt.s32.f32 %v290
      %v292 = vsel %vm286, 1, 0
      %v293 = vcvt.s32.f32 %v292
      %vm294 = vcmp.le.s32.totalorder %v278, 6
      %vm295 = vmand %vm294, %vm280
      %v296 = vsel %vm295, 1, 0
      %v297 = vcvt.s32.f32 %v296
      %v298 = vsel %vm294, 1, 0
      %v299 = vcvt.s32.f32 %v298
      %vm300 = vmand %vm294, %vm286
      %v301 = vsel %vm300, 1, 0
      %v302 = vcvt.s32.f32 %v301
      %v303 = vld [vmem:[%s269] sm:$0xff]
      %v304 = vld [vmem:[%s1] sm:$0xff]
      %v305 = vld [vmem:[%s1 + $0x8] sm:$0xff]
      %306 = vrot.lane.b32.xlu0 %v303, 9
      %v307 = vpop.permute.xlu0 %306
      %v308 = vmul.f32 %v307, %v283
      %309 = vrot.lane.b32.xlu0 %v303, 8
      %v310 = vpop.permute.xlu0 %309
      %v311 = vmul.f32 %v310, %v285
      %312 = vrot.lane.b32.xlu0 %v303, 7
      %v313 = vpop.permute.xlu0 %312
      %v314 = vmul.f32 %v313, %v289
      %315 = vrot.lane.b32.xlu0 %v303, 1
      %v316 = vpop.permute.xlu0 %315
      %v317 = vmul.f32 %v316, %v291
      %318 = vrot.lane.b32.xlu0 %v303, 127
      %v319 = vpop.permute.xlu0 %318
      %v320 = vmul.f32 %v319, %v293
      %321 = vrot.lane.b32.xlu0 %v303, 121
      %v322 = vpop.permute.xlu0 %321
      %v323 = vmul.f32 %v322, %v297
      %324 = vrot.lane.b32.xlu0 %v303, 120
      %v325 = vpop.permute.xlu0 %324
      %v326 = vmul.f32 %v325, %v299
      %327 = vrot.lane.b32.xlu0 %v303, 119
      %v328 = vpop.permute.xlu0 %327
      %v329 = vmul.f32 %v328, %v302
      %v330 = vld [vmem:[%s2] sm:$0xff]
      %v331 = vld [vmem:[%s2 + $0x8] sm:$0xff]
      %333 = vset.pattern.permute.xlu0 0
      %334 = vperm.xlu0 %333, %v330
      %v335 = vpop.permute.xlu0 %334
      %338 = vset.pattern.permute.xlu0 0
      %339 = vperm.xlu0 %338, %v331
      %v340 = vpop.permute.xlu0 %339
      %vm342 = vcmask 588800
      %v344 = vsel %vm342, %v304, 0
      %v347 = vsel %vm342, %v305, 0
      %349 = vmatprep.subr.mxu0 0.0
      %350 = vmatpush1.msra.mxu0 0.0
      %351 = vmatprep.subr.mxu0 0.0
      %352 = vmatpush1.msra.mxu0 0.0
      %353 = vmatprep.subr.mxu0 0.0
      %354 = vmatpush1.msra.mxu0 0.0
      %355 = vmatprep.subr.mxu0 0.0
      %356 = vmatpush1.msra.mxu0 0.0
      %357 = vmatprep.subr.mxu0 0.0
      %358 = vmatpush1.msra.mxu0 0.0
      %359 = vmatprep.subr.mxu0 0.0
      %360 = vmatpush1.msra.mxu0 0.0
      %361 = vmatprep.subr.mxu0 0.0
      %362 = vmatpush1.msra.mxu0 0.0
      %363 = vmatprep.subr.mxu0 0.0
      %364 = vmatpush1.msra.mxu0 %v329
      %365 = vmatprep.subr.mxu0 0.0
      %366 = vmatpush1.msra.mxu0 %v326
      %367 = vmatprep.subr.mxu0 0.0
      %368 = vmatpush1.msra.mxu0 %v323
      %369 = vmatprep.subr.mxu0 0.0
      %370 = vmatpush1.msra.mxu0 %v320
      %371 = vmatprep.subr.mxu0 0.0
      %372 = vmatpush1.msra.mxu0 %v303
      %373 = vmatprep.subr.mxu0 0.0
      %374 = vmatpush1.msra.mxu0 %v317
      %375 = vmatprep.subr.mxu0 0.0
      %376 = vmatpush1.msra.mxu0 %v314
      %377 = vmatprep.subr.mxu0 0.0
      %378 = vmatpush1.msra.mxu0 %v311
      %379 = vmatprep.subr.mxu0 0.0
      %380 = vmatpush1.msra.mxu0 %v308
      %381 = vmatprep.subr.mxu0 0.0
      %382 = vmatpush2.msra.mxu0 0.0
      %383 = vmatprep.subr.mxu0 0.0
      %384 = vmatpush2.msra.mxu0 0.0
      %385 = vmatprep.subr.mxu0 0.0
      %386 = vmatpush2.msra.mxu0 0.0
      %387 = vmatprep.subr.mxu0 0.0
      %388 = vmatpush2.msra.mxu0 0.0
      %389 = vmatprep.subr.mxu0 0.0
      %390 = vmatpush2.msra.mxu0 0.0
      %391 = vmatprep.subr.mxu0 0.0
      %392 = vmatpush2.msra.mxu0 0.0
      %393 = vmatprep.subr.mxu0 0.0
      %394 = vmatpush2.msra.mxu0 0.0
      %395 = vmatprep.subr.mxu0 0.0
      %396 = vmatpush2.msra.mxu0 0.0
      %397 = vmatprep.subr.mxu0 0.0
      %398 = vmatpush2.msra.mxu0 0.0
      %399 = vmatprep.subr.mxu0 0.0
      %400 = vmatpush2.msra.mxu0 0.0
      %401 = vmatprep.subr.mxu0 0.0
      %402 = vmatpush2.msra.mxu0 0.0
      %403 = vmatprep.subr.mxu0 0.0
      %404 = vmatpush2.msra.mxu0 0.0
      %405 = vmatprep.subr.mxu0 0.0
      %406 = vmatpush2.msra.mxu0 0.0
      %407 = vmatprep.subr.mxu0 0.0
      %408 = vmatpush2.msra.mxu0 0.0
      %409 = vmatprep.subr.mxu0 0.0
      %410 = vmatpush2.msra.mxu0 0.0
      %411 = vmatprep.subr.mxu0 0.0
      %412 = vmatpush2.msra.mxu0 0.0
      %413 = vmatprep.mubr.f32.mxu0 0.0
      %414 = vmatmul.mubr.f32.gmra.mxu0 %v344
      %v415 = vpop.f32.mrf.mxu0
      %v416 = vadd.f32 %v335, %v415
      %v417 = vpop.f32.mrf.mxu0
      %418 = vmatprep.mubr.f32.mxu0 0.0
      %419 = vmatmul.mubr.f32.gmra.mxu0 %v347
      %v420 = vpop.f32.mrf.mxu0
      %v421 = vadd.f32 %v340, %v420
      %v422 = vpop.f32.mrf.mxu0
      %423 = vdwg.mxu0
      %v424 = vmax.f32 %v416, 0.0
      %v425 = vmax.f32 %v421, 0.0
      %v426 = vld [vmem:[%s3] sm:$0xff]
      %v427 = vld [vmem:[%s3 + $0x8] sm:$0xff]
      %v428 = vld [vmem:[%s3 + $0x10] sm:$0xff]
      %v429 = vld [vmem:[%s3 + $0x18] sm:$0xff]
      %430 = vrot.lane.b32.xlu0 %v424, 9
      %v431 = vpop.permute.xlu0 %430
      %432 = vrot.lane.b32.xlu0 %v425, 9
      %v433 = vpop.permute.xlu0 %432
      %v434 = vmul.f32 %v431, %v283
      %v435 = vmul.f32 %v433, %v283
      %436 = vrot.lane.b32.xlu0 %v424, 8
      %v437 = vpop.permute.xlu0 %436
      %438 = vrot.lane.b32.xlu0 %v425, 8
      %v439 = vpop.permute.xlu0 %438
      %v440 = vmul.f32 %v437, %v285
      %v441 = vmul.f32 %v439, %v285
      %442 = vrot.lane.b32.xlu0 %v424, 7
      %v443 = vpop.permute.xlu0 %442
      %444 = vrot.lane.b32.xlu0 %v425, 7
      %v445 = vpop.permute.xlu0 %444
      %v446 = vmul.f32 %v443, %v289
      %v447 = vmul.f32 %v445, %v289
      %448 = vrot.lane.b32.xlu0 %v424, 1
      %v449 = vpop.permute.xlu0 %448
      %450 = vrot.lane.b32.xlu0 %v425, 1
      %v451 = vpop.permute.xlu0 %450
      %v452 = vmul.f32 %v449, %v291
      %v453 = vmul.f32 %v451, %v291
      %454 = vrot.lane.b32.xlu0 %v424, 127
      %v455 = vpop.permute.xlu0 %454
      %456 = vrot.lane.b32.xlu0 %v425, 127
      %v457 = vpop.permute.xlu0 %456
      %v458 = vmul.f32 %v455, %v293
      %v459 = vmul.f32 %v457, %v293
      %460 = vrot.lane.b32.xlu0 %v424, 121
      %v461 = vpop.permute.xlu0 %460
      %462 = vrot.lane.b32.xlu0 %v425, 121
      %v463 = vpop.permute.xlu0 %462
      %v464 = vmul.f32 %v461, %v297
      %v465 = vmul.f32 %v463, %v297
      %466 = vrot.lane.b32.xlu0 %v424, 120
      %v467 = vpop.permute.xlu0 %466
      %468 = vrot.lane.b32.xlu0 %v425, 120
      %v469 = vpop.permute.xlu0 %468
      %v470 = vmul.f32 %v467, %v299
      %v471 = vmul.f32 %v469, %v299
      %472 = vrot.lane.b32.xlu0 %v424, 119
      %v473 = vpop.permute.xlu0 %472
      %474 = vrot.lane.b32.xlu0 %v425, 119
      %v475 = vpop.permute.xlu0 %474
      %v476 = vmul.f32 %v473, %v302
      %v477 = vmul.f32 %v475, %v302
      %v478 = vld [vmem:[%s4] sm:$0xff]
      %v479 = vld [vmem:[%s4 + $0x8] sm:$0xff]
      %481 = vset.pattern.permute.xlu0 0
      %482 = vperm.xlu0 %481, %v478
      %v483 = vpop.permute.xlu0 %482
      %486 = vset.pattern.permute.xlu0 0
      %487 = vperm.xlu0 %486, %v479
      %v488 = vpop.permute.xlu0 %487
      %vm490 = vcmask 130048
      %v492 = vsel %vm490, %v427, 0
      %v495 = vsel %vm490, %v429, 0
      %497 = vmatprep.subr.mxu0 0.0
      %498 = vmatpush1.msra.mxu0 %v471
      %499 = vmatprep.subr.mxu0 0.0
      %500 = vmatpush1.msra.mxu0 %v470
      %501 = vmatprep.subr.mxu0 0.0
      %502 = vmatpush1.msra.mxu0 %v465
      %503 = vmatprep.subr.mxu0 0.0
      %504 = vmatpush1.msra.mxu0 %v464
      %505 = vmatprep.subr.mxu0 0.0
      %506 = vmatpush1.msra.mxu0 %v459
      %507 = vmatprep.subr.mxu0 0.0
      %508 = vmatpush1.msra.mxu0 %v458
      %509 = vmatprep.subr.mxu0 0.0
      %510 = vmatpush1.msra.mxu0 %v425
      %511 = vmatprep.subr.mxu0 0.0
      %512 = vmatpush1.msra.mxu0 %v424
      %513 = vmatprep.subr.mxu0 0.0
      %514 = vmatpush1.msra.mxu0 %v453
      %515 = vmatprep.subr.mxu0 0.0
      %516 = vmatpush1.msra.mxu0 %v452
      %517 = vmatprep.subr.mxu0 0.0
      %518 = vmatpush1.msra.mxu0 %v447
      %519 = vmatprep.subr.mxu0 0.0
      %520 = vmatpush1.msra.mxu0 %v446
      %521 = vmatprep.subr.mxu0 0.0
      %522 = vmatpush1.msra.mxu0 %v441
      %523 = vmatprep.subr.mxu0 0.0
      %524 = vmatpush1.msra.mxu0 %v440
      %525 = vmatprep.subr.mxu0 0.0
      %526 = vmatpush1.msra.mxu0 %v435
      %527 = vmatprep.subr.mxu0 0.0
      %528 = vmatpush1.msra.mxu0 %v434
      %529 = vmatprep.subr.mxu0 0.0
      %530 = vmatpush2.msra.mxu0 0.0
      %531 = vmatprep.subr.mxu0 0.0
      %532 = vmatpush2.msra.mxu0 0.0
      %533 = vmatprep.subr.mxu0 0.0
      %534 = vmatpush2.msra.mxu0 0.0
      %535 = vmatprep.subr.mxu0 0.0
      %536 = vmatpush2.msra.mxu0 0.0
      %537 = vmatprep.subr.mxu0 0.0
      %538 = vmatpush2.msra.mxu0 0.0
      %539 = vmatprep.subr.mxu0 0.0
      %540 = vmatpush2.msra.mxu0 0.0
      %541 = vmatprep.subr.mxu0 0.0
      %542 = vmatpush2.msra.mxu0 0.0
      %543 = vmatprep.subr.mxu0 0.0
      %544 = vmatpush2.msra.mxu0 0.0
      %545 = vmatprep.subr.mxu0 0.0
      %546 = vmatpush2.msra.mxu0 0.0
      %547 = vmatprep.subr.mxu0 0.0
      %548 = vmatpush2.msra.mxu0 0.0
      %549 = vmatprep.subr.mxu0 0.0
      %550 = vmatpush2.msra.mxu0 0.0
      %551 = vmatprep.subr.mxu0 0.0
      %552 = vmatpush2.msra.mxu0 0.0
      %553 = vmatprep.subr.mxu0 0.0
      %554 = vmatpush2.msra.mxu0 0.0
      %555 = vmatprep.subr.mxu0 0.0
      %556 = vmatpush2.msra.mxu0 0.0
      %557 = vmatprep.subr.mxu0 0.0
      %558 = vmatpush2.msra.mxu0 %v477
      %559 = vmatprep.subr.mxu0 0.0
      %560 = vmatpush2.msra.mxu0 %v476
      %561 = vmatprep.mubr.f32.mxu0 %v492
      %562 = vmatmul.mubr.f32.gmra.mxu0 %v426
      %v563 = vpop.f32.mrf.mxu0
      %v564 = vadd.f32 %v483, %v563
      %v565 = vpop.f32.mrf.mxu0
      %566 = vmatprep.mubr.f32.mxu0 %v495
      %567 = vmatmul.mubr.f32.gmra.mxu0 %v428
      %v568 = vpop.f32.mrf.mxu0
      %v569 = vadd.f32 %v488, %v568
      %v570 = vpop.f32.mrf.mxu0
      %571 = vdwg.mxu0
      %v572 = vmax.f32 %v564, 0.0
      %v573 = vmax.f32 %v569, 0.0
      %v574 = vld [vmem:[%s5] sm:$0xff]
      %v575 = vld [vmem:[%s6] sm:$0xff]
      %577 = vset.pattern.permute.xlu0 0
      %578 = vperm.xlu0 %577, %v575
      %v579 = vpop.permute.xlu0 %578
      %v582 = vsel %vm490, %v574, 0
      %584 = vmatprep.subr.mxu0 0.0
      %585 = vmatpush1.msra.mxu0 0.0
      %586 = vmatprep.subr.mxu0 0.0
      %587 = vmatpush1.msra.mxu0 0.0
      %588 = vmatprep.subr.mxu0 0.0
      %589 = vmatpush1.msra.mxu0 0.0
      %590 = vmatprep.subr.mxu0 0.0
      %591 = vmatpush1.msra.mxu0 0.0
      %592 = vmatprep.subr.mxu0 0.0
      %593 = vmatpush1.msra.mxu0 0.0
      %594 = vmatprep.subr.mxu0 0.0
      %595 = vmatpush1.msra.mxu0 0.0
      %596 = vmatprep.subr.mxu0 0.0
      %597 = vmatpush1.msra.mxu0 0.0
      %598 = vmatprep.subr.mxu0 0.0
      %599 = vmatpush1.msra.mxu0 0.0
      %600 = vmatprep.subr.mxu0 0.0
      %601 = vmatpush1.msra.mxu0 0.0
      %602 = vmatprep.subr.mxu0 0.0
      %603 = vmatpush1.msra.mxu0 0.0
      %604 = vmatprep.subr.mxu0 0.0
      %605 = vmatpush1.msra.mxu0 0.0
      %606 = vmatprep.subr.mxu0 0.0
      %607 = vmatpush1.msra.mxu0 0.0
      %608 = vmatprep.subr.mxu0 0.0
      %609 = vmatpush1.msra.mxu0 0.0
      %610 = vmatprep.subr.mxu0 0.0
      %611 = vmatpush1.msra.mxu0 0.0
      %612 = vmatprep.subr.mxu0 0.0
      %613 = vmatpush1.msra.mxu0 %v573
      %614 = vmatprep.subr.mxu0 0.0
      %615 = vmatpush1.msra.mxu0 %v572
      %616 = vmatprep.subr.mxu0 0.0
      %617 = vmatpush2.msra.mxu0 0.0
      %618 = vmatprep.subr.mxu0 0.0
      %619 = vmatpush2.msra.mxu0 0.0
      %620 = vmatprep.subr.mxu0 0.0
      %621 = vmatpush2.msra.mxu0 0.0
      %622 = vmatprep.subr.mxu0 0.0
      %623 = vmatpush2.msra.mxu0 0.0
      %624 = vmatprep.subr.mxu0 0.0
      %625 = vmatpush2.msra.mxu0 0.0
      %626 = vmatprep.subr.mxu0 0.0
      %627 = vmatpush2.msra.mxu0 0.0
      %628 = vmatprep.subr.mxu0 0.0
      %629 = vmatpush2.msra.mxu0 0.0
      %630 = vmatprep.subr.mxu0 0.0
      %631 = vmatpush2.msra.mxu0 0.0
      %632 = vmatprep.subr.mxu0 0.0
      %633 = vmatpush2.msra.mxu0 0.0
      %634 = vmatprep.subr.mxu0 0.0
      %635 = vmatpush2.msra.mxu0 0.0
      %636 = vmatprep.subr.mxu0 0.0
      %637 = vmatpush2.msra.mxu0 0.0
      %638 = vmatprep.subr.mxu0 0.0
      %639 = vmatpush2.msra.mxu0 0.0
      %640 = vmatprep.subr.mxu0 0.0
      %641 = vmatpush2.msra.mxu0 0.0
      %642 = vmatprep.subr.mxu0 0.0
      %643 = vmatpush2.msra.mxu0 0.0
      %644 = vmatprep.subr.mxu0 0.0
      %645 = vmatpush2.msra.mxu0 0.0
      %646 = vmatprep.subr.mxu0 0.0
      %647 = vmatpush2.msra.mxu0 0.0
      %648 = vmatprep.mubr.f32.mxu0 0.0
      %649 = vmatmul.mubr.f32.gmra.mxu0 %v582
      %v650 = vpop.f32.mrf.mxu0
      %v651 = vadd.f32 %v579, %v650
      %v652 = vpop.f32.mrf.mxu0
      %653 = vdwg.mxu0
      %v654 = vmax.f32 %v651, 0.0
      %v655 = vadd.f32 %v654, %v303
      %656 = vst [vmem:[%s273] sm:$0xff] %v655
      %p657 = scmp.lt.s32.totalorder %s18, 1
      %s658 = scalar_select %p657, %s18, 1
      %s659 = smul.addr %s658, 8
      %s660 = scalar_lea.vmem %s7, %s659
      // Predicated region
      $region49: #{chess_feature_extractor.1} parent=47 // pred_check
        %p661 = pneg %p188
      $region50: #{chess_feature_extractor.1} parent=47 // pred_check_branch
        %663 = sbr.rel (%p661) target = $region52
      $region51: #{chess_feature_extractor.1} parent=47 // pred_region
        _
      $region52: #{chess_feature_extractor.1} parent=47 // pred_fallthru
        _
    $region48: #{chess_feature_extractor.1} parent=5 // pred_fallthru
      _
    %p664 = scmp.le.s32.totalorder 2, %s13
    // Predicated region
    $region53: #{chess_feature_extractor.1} parent=5 // pred_check
      %p665 = pneg %p664
    $region54: #{chess_feature_extractor.1} parent=5 // pred_check_branch
      %667 = sbr.rel (%p665) target = $region56
    $region55: #{chess_feature_extractor.1} parent=5 // pred_region
      %s668 = ssub.s32 %s13, 2
      // Predicated region
      $region57: #{chess_feature_extractor.1} parent=55 // pred_check
        %p669 = pneg %p194
      $region58: #{chess_feature_extractor.1} parent=55 // pred_check_branch
        %671 = sbr.rel (%p669) target = $region60
      $region59: #{chess_feature_extractor.1} parent=55 // pred_region
        %p672 = scmp.lt.s32.totalorder %s19, 1
        %s673 = scalar_select %p672, %s19, 1
        %s674 = smul.addr %s673, 8
        %s675 = scalar_lea.vmem %s7, %s674
      $region60: #{chess_feature_extractor.1} parent=55 // pred_fallthru
        _
    $region56: #{chess_feature_extractor.1} parent=5 // pred_fallthru
      _
  $region6: #{chess_feature_extractor.1} parent=0 // loop_footer
    %s17 = sadd.s32 1, %s13
  $region7: #{chess_feature_extractor.1} parent=0 // loop_footer_branch
    %12 = sbr.rel target = $region3
  $region8: #{chess_feature_extractor.1} parent=0 // loop_exit
    _

</llo_original>
